<compile_context>
chip_gen: v7x
topology: tpu7x:2x2x1
jax: 0.10.0
libtpu: 0.0.40
codegen_flags: <defaults>
</compile_context>

<pallas_src>
import functools

import jax
import jax.numpy as jnp
from jax import lax
from jax.experimental import pallas as pl
from jax.experimental.pallas import tpu as pltpu


# ---------------------------------------------------------------------------
# In-kernel math
# ---------------------------------------------------------------------------
def _inv_norm(x, power: float, axis: int):
    """1 / (||x||_p + 1e-7) reduced over `axis` (keepdims)."""
    power = float(power)
    if power == 2.0:
        norm = jnp.sqrt(jnp.sum(x * x, axis=axis, keepdims=True))
    else:
        if power.is_integer() and power > 0:
            # Repeated VALU multiplies: exact for negative inputs (matches
            # torch.pow for integer exponents) and keeps the EUP free.
            xp = lax.integer_pow(x, int(power))
        else:
            xp = jnp.power(x, power)  # fractional p: parity with torch.pow
        # The only transcendental is on the already-reduced row.
        norm = jnp.power(jnp.sum(xp, axis=axis, keepdims=True), 1.0 / power)
    return 1.0 / (norm + 1e-7)


def _lnorm_kernel_cs(x_ref, o_ref, *, power: float):
    # (C, TS) tile (batch dim squeezed): channels on sublanes, reduce axis 0.
    x = x_ref[...].astype(jnp.float32)
    o_ref[...] = (x * _inv_norm(x, power, axis=0)).astype(o_ref.dtype)


def _lnorm_kernel_ncs(x_ref, o_ref, *, power: float):
    # (NB, C, S) block: several batch items per block, reduce channel axis 1.
    x = x_ref[...].astype(jnp.float32)
    o_ref[...] = (x * _inv_norm(x, power, axis=1)).astype(o_ref.dtype)


def _lnorm_kernel_nc(x_ref, o_ref, *, power: float):
    # (TN, C) block: channels on lanes, reduce over lanes (XLU slot is idle).
    x = x_ref[...].astype(jnp.float32)
    o_ref[...] = (x * _inv_norm(x, power, axis=-1)).astype(o_ref.dtype)


# ---------------------------------------------------------------------------
# Tiling helpers
# ---------------------------------------------------------------------------
def _vmem_limit_bytes(block_nbytes: int) -> int:
    # in + out, double-buffered (4x block) + f32 temporaries / headroom.
    # Cap at 48 MiB: inside v7x's 64 MiB physical VMEM, trivially fine on
    # v5e/v6e (128 MiB physical, but only a 16/32 MiB scoped default).
    return int(min(48 * 1024 * 1024, max(24 * 1024 * 1024, 6 * block_nbytes)))


def _lnorm_spatial_tiled(x3, power: float, block_bytes: int):
    """Grid (N, S/TS); lane-dense spatial tiles, ragged last tile allowed."""
    n, c, s = x3.shape
    itemsize = jnp.dtype(x3.dtype).itemsize
    bpe = max(c * itemsize, 1)                       # bytes per lane-column
    budget_ts = max(128, ((block_bytes // bpe) // 128) * 128)
    if s % 128 == 0:
        ts = min(budget_ts, s)
    elif s <= budget_ts:
        ts = s                                       # single full-extent block
    else:
        ts = budget_ts                               # ragged (masked) last tile
    # Keep >= ~8 grid steps (pipeline overlap + v7x dual-TC sharding) as long
    # as blocks stay >= ~512 KiB so per-step overhead stays amortized.
    while (n * pl.cdiv(s, ts) < 8 and ts % 256 == 0
           and (ts // 2) * bpe >= 512 * 1024):
        ts //= 2
    grid = (n, pl.cdiv(s, ts))
    kernel = functools.partial(_lnorm_kernel_cs, power=power)
    return pl.pallas_call(
        kernel,
        out_shape=jax.ShapeDtypeStruct((n, c, s), x3.dtype),
        grid_spec=pltpu.PrefetchScalarGridSpec(
            num_scalar_prefetch=0,
            grid=grid,
            in_specs=[pl.BlockSpec((pl.Squeezed(), c, ts), lambda i, j: (i, 0, j))],
            out_specs=pl.BlockSpec((pl.Squeezed(), c, ts), lambda i, j: (i, 0, j)),
        ),
        compiler_params=pltpu.CompilerParams(
            dimension_semantics=("parallel", "parallel"),
            vmem_limit_bytes=_vmem_limit_bytes(c * ts * itemsize),
        ),
    )(x3)


def _lnorm_batch_packed(x3, power: float, block_bytes: int):
    """Grid (N/NB,); several batch items per block for tiny / non-aligned S."""
    n, c, s = x3.shape
    itemsize = jnp.dtype(x3.dtype).itemsize
    per_item = max(c * s * itemsize, 1)
    nb = max(1, min(n, block_bytes // per_item))
    # Only bother keeping >= ~8 grid steps when the tensor is big enough for
    # pipelining / megacore sharding to matter.
    if n * per_item >= 8 * 1024 * 1024:
        nb = min(nb, max(1, pl.cdiv(n, 8)))
    grid = (pl.cdiv(n, nb),)
    kernel = functools.partial(_lnorm_kernel_ncs, power=power)
    return pl.pallas_call(
        kernel,
        out_shape=jax.ShapeDtypeStruct((n, c, s), x3.dtype),
        grid_spec=pltpu.PrefetchScalarGridSpec(
            num_scalar_prefetch=0,
            grid=grid,
            in_specs=[pl.BlockSpec((nb, c, s), lambda i: (i, 0, 0))],
            out_specs=pl.BlockSpec((nb, c, s), lambda i: (i, 0, 0)),
        ),
        compiler_params=pltpu.CompilerParams(
            dimension_semantics=("parallel",),
            vmem_limit_bytes=_vmem_limit_bytes(nb * per_item),
        ),
    )(x3)


def _lnorm_nc(x, power: float, block_bytes: int):
    """Pure (N, C) inputs: tile N on sublanes, reduce over the lane axis."""
    n, c = x.shape
    itemsize = jnp.dtype(x.dtype).itemsize
    per_row = max(c * itemsize, 1)
    tn = max(8, ((block_bytes // per_row) // 8) * 8)
    tn = n if tn >= n else tn
    grid = (pl.cdiv(n, tn),)
    kernel = functools.partial(_lnorm_kernel_nc, power=power)
    return pl.pallas_call(
        kernel,
        out_shape=jax.ShapeDtypeStruct((n, c), x.dtype),
        grid_spec=pltpu.PrefetchScalarGridSpec(
            num_scalar_prefetch=0,
            grid=grid,
            in_specs=[pl.BlockSpec((tn, c), lambda i: (i, 0))],
            out_specs=pl.BlockSpec((tn, c), lambda i: (i, 0)),
        ),
        compiler_params=pltpu.CompilerParams(
            dimension_semantics=("parallel",),
            vmem_limit_bytes=_vmem_limit_bytes(tn * per_row),
        ),
    )(x)


# ---------------------------------------------------------------------------
# Public wrapper
# ---------------------------------------------------------------------------
def lnorm(x, power: float = 2.0, *, block_bytes: int = 4 * 1024 * 1024):
    """Applies LNorm over axis 1 of an NC / NCL / NCHW / NCDHW tensor."""
    if x.ndim < 2:
        raise ValueError("LNorm expects at least 2 dims (N, C, ...)")
    if x.ndim == 2:
        return _lnorm_nc(x, power, block_bytes)

    orig_shape = x.shape
    n, c = int(orig_shape[0]), int(orig_shape[1])
    s = 1
    for d in orig_shape[2:]:
        s *= int(d)
    x3 = x.reshape(n, c, s)
    itemsize = jnp.dtype(x.dtype).itemsize
    per_item = c * s * itemsize
    if n > 1 and per_item * 2 <= block_bytes:
        out3 = _lnorm_batch_packed(x3, power, block_bytes)
    else:
        out3 = _lnorm_spatial_tiled(x3, power, block_bytes)
    return out3.reshape(orig_shape)


# ---------------------------------------------------------------------------
# Reference + tests
# ---------------------------------------------------------------------------
def _lnorm_ref(x, power: float = 2.0):
    xf = x.astype(jnp.float32)
    p = float(power)
    xpow = xf ** int(p) if p.is_integer() else jnp.power(xf, p)
    norm = jnp.sum(xpow, axis=1, keepdims=True) ** (1.0 / p)
    return (xf / (norm + 1e-7)).astype(x.dtype)


if __name__ == "__main__":
    key = jax.random.PRNGKey(0)
    k0, k1, k2, k3, k4 = jax.random.split(key, 5)

    # 1) Small NCHW (batch-packed path; S=256).
    x = jax.random.normal(k0, (2, 4, 16, 16), dtype=jnp.float32)
    out = jax.block_until_ready(lnorm(x, power=2.0))
    assert out.shape == x.shape
    assert jnp.allclose(out, _lnorm_ref(x), atol=1e-5, rtol=1e-5)

    # 2) Spatial-tiled path with a ragged (masked) last tile:
    #    S=384, budget forces ts=256 -> tiles [256, 128-of-256].
    x2 = jax.random.normal(k1, (2, 8, 16, 24), dtype=jnp.float32)
    out2 = jax.block_until_ready(lnorm(x2, block_bytes=8 * 1024))
    assert jnp.allclose(out2, _lnorm_ref(x2), atol=1e-5, rtol=1e-5)

    # 3) Non-128-aligned small spatial (7x7): batch-packed blocks,
    #    including a ragged batch block when NB doesn't divide N.
    x3 = jax.random.normal(k2, (16, 8, 7, 7), dtype=jnp.float32)
    out3 = jax.block_until_ready(lnorm(x3))
    assert jnp.allclose(out3, _lnorm_ref(x3), atol=1e-5, rtol=1e-5)
    out3b = jax.block_until_ready(lnorm(x3, block_bytes=8 * 1024))
    assert jnp.allclose(out3b, _lnorm_ref(x3), atol=1e-5, rtol=1e-5)

    # 4) bf16 input exercises the dtype-aware budget (f32 accumulation inside).
    x4 = jax.random.normal(k3, (2, 4, 16, 16), dtype=jnp.float32).astype(jnp.bfloat16)
    out4 = jax.block_until_ready(lnorm(x4))
    assert jnp.allclose(out4.astype(jnp.float32),
                        _lnorm_ref(x4).astype(jnp.float32), atol=2e-2, rtol=2e-2)

    # 5) Pure NC path (no wrapper transposes, lane-axis reduction).
    x5 = jax.random.normal(k4, (16, 32), dtype=jnp.float32)
    out5 = jax.block_until_ready(lnorm(x5))
    assert jnp.allclose(out5, _lnorm_ref(x5), atol=1e-5, rtol=1e-5)

    # 6) Non-default powers: even integer on signed data (VALU integer_pow),
    #    odd integer on positive data (fractional root on the reduced row).
    out6 = jax.block_until_ready(lnorm(x, power=4))
    assert jnp.allclose(out6, _lnorm_ref(x, power=4), atol=1e-5, rtol=1e-5)
    x_pos = jnp.abs(x) + 0.1
    out7 = jax.block_until_ready(lnorm(x_pos, power=3))
    assert jnp.allclose(out7, _lnorm_ref(x_pos, power=3), atol=1e-5, rtol=1e-5)

    print("KERNEL_OK")
</pallas_src>

<mosaic_0001>
module attributes {stable_mosaic.version = 11 : i64} {
  func.func @_lnorm_kernel_ncs(%arg0: i32, %arg1: memref<2x4x256xf32, #tpu.memory_space<vmem>>, %arg2: memref<2x4x256xf32, #tpu.memory_space<vmem>>) attributes {dimension_semantics = [#tpu.dimension_semantics<parallel>], iteration_bounds = array<i64: 1>, scalar_prefetch = 0 : i64, scratch_operands = 0 : i64, tpu.core_type = #tpu.core_type<tc>, window_params = [{transform_indices = @transform_0, window_bounds = array<i64: 2, 4, 256>}, {transform_indices = @transform_1, window_bounds = array<i64: 2, 4, 256>}]} {
    %c0 = arith.constant 0 : index
    %c0_0 = arith.constant 0 : index
    %c0_1 = arith.constant 0 : index
    %0 = vector.load %arg1[%c0, %c0_0, %c0_1] : memref<2x4x256xf32, #tpu.memory_space<vmem>>, vector<2x4x256xf32>
    %1 = arith.mulf %0, %0 : vector<2x4x256xf32>
    %cst = arith.constant dense<0.000000e+00> : vector<2x256xf32>
    %2 = vector.multi_reduction <add>, %1, %cst [1] : vector<2x4x256xf32> to vector<2x256xf32>
    %3 = vector.shape_cast %2 : vector<2x256xf32> to vector<2x1x256xf32>
    %4 = math.sqrt %3 : vector<2x1x256xf32>
    %cst_2 = arith.constant 1.000000e-07 : f32
    %5 = vector.broadcast %cst_2 : f32 to vector<2x1x256xf32>
    %6 = arith.addf %4, %5 : vector<2x1x256xf32>
    %cst_3 = arith.constant 1.000000e+00 : f32
    %7 = vector.broadcast %cst_3 : f32 to vector<2x1x256xf32>
    %8 = arith.divf %7, %6 : vector<2x1x256xf32>
    %9 = vector.broadcast %8 : vector<2x1x256xf32> to vector<2x4x256xf32>
    %10 = arith.mulf %0, %9 : vector<2x4x256xf32>
    %c0_4 = arith.constant 0 : index
    %c0_5 = arith.constant 0 : index
    %c0_6 = arith.constant 0 : index
    %11 = vector.load %arg2[%c0_4, %c0_5, %c0_6] : memref<2x4x256xf32, #tpu.memory_space<vmem>>, vector<2x4x256xf32>
    tpu.vector_store %arg2[%c0_4, %c0_5, %c0_6], %10 {strides = array<i32>} : memref<2x4x256xf32, #tpu.memory_space<vmem>>, vector<2x4x256xf32>,
    return
  }
  func.func @transform_0(%arg0: i32) -> (i32, i32, i32) {
    %c0_i32 = arith.constant 0 : i32
    %c0_i32_0 = arith.constant 0 : i32
    %c0_i32_1 = arith.constant 0 : i32
    return %arg0, %c0_i32, %c0_i32_0 : i32, i32, i32
  }
  func.func @transform_1(%arg0: i32) -> (i32, i32, i32) {
    %c0_i32 = arith.constant 0 : i32
    %c0_i32_0 = arith.constant 0 : i32
    %c0_i32_1 = arith.constant 0 : i32
    return %arg0, %c0_i32, %c0_i32_0 : i32, i32, i32
  }
}

</mosaic_0001>

<llo_original>
// kernel: tpu_custom_call.1
$region0: #{tpu_custom_call.1}
  #allocation0 [shape = 'u32[]', space=smem, size = 0x4, offset = 0x4, fixed_abs, tag = 'smem constant byte address 0x4 - core index']
  #allocation1 [shape = 'u32[144,128]{1,0:T(1,128)}', space=vmem, size = 0x12000, scoped, tag = 'internal scratch']
  %s0 = inlined_call_operand.hbm [shape: f32[2,4,256], index: 0, kind: input, shape index: {}]
  %s1 = inlined_call_operand.hbm [shape: f32[2,4,256], index: 1, kind: output, shape index: {}]
  %s2 = sld [smem:[#allocation0]]
  $region18: #{tpu_custom_call.1} parent=0
    _
  %s4 = ssub.s32 1, %s2
  %s5 = scalar_select 0, %s4, %s2
  $region1: #{tpu_custom_call.1} parent=0
    #allocation2 [shape = 'u8[8192]{0}', space=vmem, size = 0x2000, scoped, tag = 'input window, operand 0, single buffered']
    #allocation3 [shape = 's32[1]{0}', space=sflag, size = 0x4, scoped, tag = 'scoped memory for tpu_custom_call.1']
    #allocation4 [shape = 's32[1]{0}', space=sflag, size = 0x4, scoped, tag = 'scoped memory for tpu_custom_call.1']
    #allocation5 [shape = 'u8[8192]{0}', space=vmem, size = 0x2000, scoped, tag = 'output window, operand 0, single buffered']
    %6 = vsyncpa [#allocation3], 0
    %7 = vsyncpa [#allocation4], 0
    // Predicated region
    $region2: #{tpu_custom_call.1} parent=1 // pred_check
      _
    $region3: #{tpu_custom_call.1} parent=1 // pred_check_branch
      %9 = sbr.rel (0) target = $region5
    $region4: #{tpu_custom_call.1} parent=1 // pred_region
      %s11 = ssub.s32 256, 256
      %12 = vsyncadd [#allocation3], %s11
      %s13 = sshll.u32 [#allocation2], 4
      %s14 = int_to_ptr.vmem [resolvable:$true] %s13
      %19 = dma.hbm_to_vmem [thread:$0]  %s0, 256, %s14, [#allocation3], 128, 128, 8
    $region5: #{tpu_custom_call.1} parent=1 // pred_fallthru
      _
    // Predicated region
    $region6: #{tpu_custom_call.1} parent=1 // pred_check
      _
    $region7: #{tpu_custom_call.1} parent=1 // pred_check_branch
      %21 = sbr.rel (0) target = $region9
    $region8: #{tpu_custom_call.1} parent=1 // pred_region
      %22 = dma.done [#allocation3], 256
    $region9: #{tpu_custom_call.1} parent=1 // pred_fallthru
      _
    %v23 = vld [vmem:[#allocation2] sm:$0xff]
    %v24 = vld [vmem:[#allocation2 + $0x8] sm:$0xff]
    %v25 = vmul.f32 %v23, %v23
    %v26 = vmul.f32 %v24, %v24
    %v29 = vcombine.high %v25, %v25
    %v30 = vcombine.high %v26, %v26
    %vm33 = vcmask 1043456
    %v34 = vsel %vm33, %v25, 0.0
    %v35 = vrot.slane %v34, 4
    %v36 = vadd.f32 %v34, %v35
    %v37 = vrot.slane %v36, 2
    %v38 = vadd.f32 %v36, %v37
    %v39 = vrot.slane %v38, 1
    %v40 = vadd.f32 %v38, %v39
    %v41 = vsel %vm33, %v29, 0.0
    %v42 = vrot.slane %v41, 4
    %v43 = vadd.f32 %v41, %v42
    %v44 = vrot.slane %v43, 2
    %v45 = vadd.f32 %v43, %v44
    %v46 = vrot.slane %v45, 1
    %v47 = vadd.f32 %v45, %v46
    %v48 = vsel %vm33, %v26, 0.0
    %v49 = vrot.slane %v48, 4
    %v50 = vadd.f32 %v48, %v49
    %v51 = vrot.slane %v50, 2
    %v52 = vadd.f32 %v50, %v51
    %v53 = vrot.slane %v52, 1
    %v54 = vadd.f32 %v52, %v53
    %v55 = vsel %vm33, %v30, 0.0
    %v56 = vrot.slane %v55, 4
    %v57 = vadd.f32 %v55, %v56
    %v58 = vrot.slane %v57, 2
    %v59 = vadd.f32 %v57, %v58
    %v60 = vrot.slane %v59, 1
    %v61 = vadd.f32 %v59, %v60
    %v62 = vrsqrt.pop %v40
    %v63 = vmul.f32 %v40, %v62
    %vm64 = vcmp.eq.f32.partialorder %v40, inf
    %v65 = vsel %vm64, %v40, %v63
    %vm66 = vcmp.eq.f32.partialorder %v40, 0.0
    %v67 = vand.u32 %v40, 2147483648
    %v68 = vsel %vm66, %v67, %v65
    %v69 = vrsqrt.pop %v47
    %v70 = vmul.f32 %v47, %v69
    %vm71 = vcmp.eq.f32.partialorder %v47, inf
    %v72 = vsel %vm71, %v47, %v70
    %vm73 = vcmp.eq.f32.partialorder %v47, 0.0
    %v74 = vand.u32 %v47, 2147483648
    %v75 = vsel %vm73, %v74, %v72
    %v76 = vrsqrt.pop %v54
    %v77 = vmul.f32 %v54, %v76
    %vm78 = vcmp.eq.f32.partialorder %v54, inf
    %v79 = vsel %vm78, %v54, %v77
    %vm80 = vcmp.eq.f32.partialorder %v54, 0.0
    %v81 = vand.u32 %v54, 2147483648
    %v82 = vsel %vm80, %v81, %v79
    %v83 = vrsqrt.pop %v61
    %v84 = vmul.f32 %v61, %v83
    %vm85 = vcmp.eq.f32.partialorder %v61, inf
    %v86 = vsel %vm85, %v61, %v84
    %vm87 = vcmp.eq.f32.partialorder %v61, 0.0
    %v88 = vand.u32 %v61, 2147483648
    %v89 = vsel %vm87, %v88, %v86
    %v90 = vadd.f32 %v68, 1e-07
    %v91 = vadd.f32 %v75, 1e-07
    %v92 = vadd.f32 %v82, 1e-07
    %v93 = vadd.f32 %v89, 1e-07
    %v94 = vrcp.pop %v90
    %v95 = vmul.f32 1.0, %v94
    %v96 = vrcp.pop %v91
    %v97 = vmul.f32 1.0, %v96
    %v98 = vrcp.pop %v92
    %v99 = vmul.f32 1.0, %v98
    %v100 = vrcp.pop %v93
    %v101 = vmul.f32 1.0, %v100
    %v106 = vcombine.low %v95, %v97
    %v107 = vcombine.low %v99, %v101
    %v110 = vmul.f32 %v23, %v106
    %v111 = vmul.f32 %v24, %v107
    %112 = vst [vmem:[#allocation5] sm:$0xff] %v110
    %113 = vst [vmem:[#allocation5 + $0x8] sm:$0xff] %v111
    // Predicated region
    $region10: #{tpu_custom_call.1} parent=1 // pred_check
      _
    $region11: #{tpu_custom_call.1} parent=1 // pred_check_branch
      %115 = sbr.rel (0) target = $region13
    $region12: #{tpu_custom_call.1} parent=1 // pred_region
      %s117 = ssub.s32 256, 256
      %118 = vsyncadd [#allocation4], %s117
      %s119 = sshll.u32 [#allocation5], 4
      %s120 = int_to_ptr.vmem [resolvable:$true] %s119
      %125 = dma.vmem_to_hbm [thread:$0]  %s120, 256, %s1, [#allocation4], 128, 128, 8
    $region13: #{tpu_custom_call.1} parent=1 // pred_fallthru
      _
    // Predicated region
    $region14: #{tpu_custom_call.1} parent=1 // pred_check
      _
    $region15: #{tpu_custom_call.1} parent=1 // pred_check_branch
      %127 = sbr.rel (0) target = $region17
    $region16: #{tpu_custom_call.1} parent=1 // pred_region
      %128 = dma.done [#allocation4], 256
    $region17: #{tpu_custom_call.1} parent=1 // pred_fallthru
      _
    %129 = vsyncpa [#allocation3], 1
    %130 = vsyncpa [#allocation4], 1

</llo_original>
